<compile_context>
chip_gen: v6e
topology: v6e:2x2x1
jax: 0.10.0
libtpu: 0.0.40
codegen_flags: <defaults>
</compile_context>

<pallas_src>
import functools

import jax
import jax.numpy as jnp
from jax.experimental import pallas as pl
from jax.experimental.pallas import tpu as pltpu


def _round_up(x, m):
    return ((x + m - 1) // m) * m


def _vmem_capacity_bytes():
    """Physical VMEM per TensorCore; falls back to 128 MiB if unqueryable."""
    try:
        cap = int(pltpu.get_tpu_info().vmem_capacity_bytes)
        if cap > 0:
            return cap
    except Exception:
        pass
    return 128 << 20


def _residual_block_kernel(x_ref, w_ref, b_ref, g_ref, beta_ref, o_ref,
                           acc_ref, *, d_model, tk, n_k, eps):
    k = pl.program_id(1)

    # ---- init: bias broadcast into the f32 accumulator (first K step) ----
    @pl.when(k == 0)
    def _():
        acc_ref[...] = jnp.broadcast_to(
            b_ref[...].astype(jnp.float32), acc_ref.shape)

    # ---- t: partial matmul on the MXU (native dtype in, f32 accumulate) ----
    acc_ref[...] += jnp.dot(x_ref[...], w_ref[...],
                            preferred_element_type=jnp.float32)

    # ---- a: residual add (pos=0).  The K-slice of x covers the same column
    #      range of the (square) output, so the residual accumulates per K
    #      step without a second full-width read of x. ----
    if n_k == 1:
        acc_ref[...] += x_ref[...].astype(jnp.float32)
    else:
        col = pl.multiple_of(k * tk, tk)   # tk is a multiple of 128 here
        acc_ref[:, pl.ds(col, tk)] += x_ref[...].astype(jnp.float32)

    # d: dropout -> identity at inference.
    # TODO(synk): train-mode dropout (stochastic masking) intentionally omitted.

    # ---- n: LayerNorm epilogue (torch std semantics), last K step only ----
    @pl.when(k == n_k - 1)
    def _():
        y = acc_ref[...]
        mean = jnp.mean(y, axis=-1, keepdims=True)
        diff = y - mean
        var = jnp.sum(diff * diff, axis=-1, keepdims=True) * (1.0 / (d_model - 1))
        s = jnp.sqrt(var) + eps                    # torch: divide by (std + eps)
        inv = pl.reciprocal(s, approx=True)        # EUP slot (frees VALU)
        inv = inv * (2.0 - s * inv)                # one Newton step -> f32 accuracy
        out = g_ref[...].astype(jnp.float32) * (diff * inv) \
            + beta_ref[...].astype(jnp.float32)
        o_ref[...] = out.astype(o_ref.dtype)


def residual_block(x, w, b, gamma, beta, *, eps=1e-6, tm=None, k_block=None):
    """x: [batch, seq, d_model]; w: [d_model, d_model] (x @ w layout)."""
    batch, seq, d_model = x.shape
    assert d_model > 1, "unbiased std divides by (d_model - 1)"
    rows = batch * seq

    x_isz = jnp.dtype(x.dtype).itemsize
    w_isz = jnp.dtype(w.dtype).itemsize

    vmem_cap = _vmem_capacity_bytes()
    small_vmem = vmem_cap <= (64 << 20)        # v7x-like TC (2 cores, 64 MiB)

    # ---- K (reduction) tiling: stream W when it would crowd VMEM ----
    if k_block is not None:
        tk = int(k_block)
        assert d_model % tk == 0 and (tk == d_model or tk % 128 == 0)
    elif d_model % 128 == 0 and d_model * d_model * w_isz > (8 << 20):
        tk = next(c for c in (1024, 512, 256, 128) if d_model % c == 0)
    else:
        tk = d_model                            # weight stays fully resident
    n_k = d_model // tk

    # ---- Row tiling (generation-aware), no padding: partial last block ----
    if tm is None:
        tm = 256 if small_vmem else 512
    tm_eff = min(tm, _round_up(rows, 8))
    if small_vmem and rows > 8 and pl.cdiv(rows, tm_eff) < 2:
        # Feed both TensorCores on 2-TC chips.
        tm_eff = _round_up(pl.cdiv(rows, 2), 8)
    n_rows = pl.cdiv(rows, tm_eff)

    x2 = x.reshape(rows, d_model)
    b2 = b.reshape(1, d_model)
    g2 = gamma.reshape(1, d_model)
    beta2 = beta.reshape(1, d_model)

    # ---- Weight BlockSpec: resident (single-buffered) or K-streamed ----
    if n_k == 1:
        w_spec = pl.BlockSpec((d_model, d_model), lambda i, k: (0, 0),
                              pipeline_mode=pl.Buffered(1))
        w_resident = d_model * d_model * w_isz
    else:
        w_spec = pl.BlockSpec((tk, d_model), lambda i, k: (k, 0))
        w_resident = 2 * tk * d_model * w_isz   # double-buffered stream

    # ---- VMEM budget from the actual tiles + f32 intermediates ----
    io_bytes = 2 * tm_eff * tk * x_isz + 2 * tm_eff * d_model * x_isz
    acc_bytes = tm_eff * d_model * 4
    interm_bytes = 4 * tm_eff * d_model * 4     # dot result / diff / out etc.
    param_bytes = 3 * 8 * _round_up(d_model, 128) * 4
    need = (w_resident + io_bytes + acc_bytes + interm_bytes + param_bytes
            + (4 << 20))                        # compiler scratch headroom
    vmem_cap_limit = max((vmem_cap * 3) // 4, 32 << 20)   # 48 MiB on 64 MiB TC
    vmem_limit = int(min(max(need, 32 << 20), vmem_cap_limit))

    kernel = functools.partial(_residual_block_kernel,
                               d_model=d_model, tk=tk, n_k=n_k, eps=eps)

    cost = pl.CostEstimate(
        flops=2 * rows * d_model * d_model,
        transcendentals=2 * rows,               # sqrt + reciprocal per row
        bytes_accessed=(2 * rows * d_model * x_isz
                        + n_rows * d_model * d_model * w_isz
                        + 3 * d_model * 4))

    # NOTE: for real model sizes keep d_model a multiple of 128 so the output
    # stays lane-dense (the toy d_model=32 case is correct but lane-masked).
    # TODO(synk): optional bf16/fp8 weight cast for the matmul (v5e/v7x MXU
    # throughput) is accuracy-dependent and left behind the caller's dtype.
    out2 = pl.pallas_call(
        kernel,
        out_shape=jax.ShapeDtypeStruct((rows, d_model), x.dtype),
        grid_spec=pltpu.PrefetchScalarGridSpec(
            num_scalar_prefetch=0,
            grid=(n_rows, n_k),
            in_specs=[
                pl.BlockSpec((tm_eff, tk), lambda i, k: (i, k)),      # x rows
                w_spec,                                               # W
                pl.BlockSpec((1, d_model), lambda i, k: (0, 0),
                             pipeline_mode=pl.Buffered(1)),           # bias
                pl.BlockSpec((1, d_model), lambda i, k: (0, 0),
                             pipeline_mode=pl.Buffered(1)),           # gamma
                pl.BlockSpec((1, d_model), lambda i, k: (0, 0),
                             pipeline_mode=pl.Buffered(1)),           # beta
            ],
            out_specs=pl.BlockSpec((tm_eff, d_model), lambda i, k: (i, 0)),
            scratch_shapes=[pltpu.VMEM((tm_eff, d_model), jnp.float32)],
        ),
        compiler_params=pltpu.CompilerParams(
            dimension_semantics=("parallel", "arbitrary"),
            vmem_limit_bytes=vmem_limit),
        cost_estimate=cost,
    )(x2, w, b2, g2, beta2)

    return out2.reshape(batch, seq, d_model)


def residual_block_ref(x, w, b, gamma, beta, eps=1e-6):
    """Pure-JAX reference mirroring the PyTorch forward exactly."""
    x32 = x.astype(jnp.float32)
    y = jnp.dot(x32, w.astype(jnp.float32)) + b.astype(jnp.float32)   # t
    y = x32 + y                                                       # a (d = id)
    mean = y.mean(-1, keepdims=True)
    std = jnp.sqrt(((y - mean) ** 2).sum(-1, keepdims=True) / (y.shape[-1] - 1))
    return (gamma * (y - mean) / (std + eps) + beta).astype(x.dtype)


if __name__ == "__main__":
    key = jax.random.PRNGKey(0)

    def run_case(batch, seq, d_model, k_block=None, tol=1e-4):
        kx, kw, kb, kg, kbt = jax.random.split(jax.random.fold_in(key, d_model), 5)
        x = jax.random.normal(kx, (batch, seq, d_model), dtype=jnp.float32)
        w = jax.random.normal(kw, (d_model, d_model), dtype=jnp.float32) * 0.05
        b = jax.random.normal(kb, (d_model,), dtype=jnp.float32) * 0.05
        gamma = 1.0 + 0.1 * jax.random.normal(kg, (d_model,), dtype=jnp.float32)
        beta = 0.1 * jax.random.normal(kbt, (d_model,), dtype=jnp.float32)

        out = residual_block(x, w, b, gamma, beta, k_block=k_block)
        jax.block_until_ready(out)
        ref = residual_block_ref(x, w, b, gamma, beta)
        assert out.shape == (batch, seq, d_model)
        err = float(jnp.max(jnp.abs(out - ref)))
        assert jnp.allclose(out, ref, atol=tol, rtol=tol), f"max abs err {err}"

    # Small shape consistent with the module (single K step, resident weight).
    run_case(batch=2, seq=8, d_model=32, tol=1e-4)
    # Small shape forcing the K-streamed weight path (n_k = 2).
    run_case(batch=2, seq=16, d_model=256, k_block=128, tol=5e-4)

    print("KERNEL_OK")
</pallas_src>

<mosaic_0001>
module attributes {stable_mosaic.version = 11 : i64} {
  func.func @_residual_block_kernel(%arg0: i32, %arg1: i32, %arg2: memref<16x32xf32, #tpu.memory_space<vmem>>, %arg3: memref<32x32xf32, #tpu.memory_space<vmem>>, %arg4: memref<1x32xf32, #tpu.memory_space<vmem>>, %arg5: memref<1x32xf32, #tpu.memory_space<vmem>>, %arg6: memref<1x32xf32, #tpu.memory_space<vmem>>, %arg7: memref<16x32xf32, #tpu.memory_space<vmem>>, %arg8: memref<16x32xf32, #tpu.memory_space<vmem>>) attributes {dimension_semantics = [#tpu.dimension_semantics<parallel>, #tpu.dimension_semantics<arbitrary>], iteration_bounds = array<i64: 1, 1>, scalar_prefetch = 0 : i64, scratch_operands = 1 : i64, tpu.core_type = #tpu.core_type<tc>, window_params = [{transform_indices = @transform_0, window_bounds = array<i64: 16, 32>}, {pipeline_mode = #tpu.pipeline_mode<synchronous>, transform_indices = @transform_1, window_bounds = array<i64: 32, 32>}, {pipeline_mode = #tpu.pipeline_mode<synchronous>, transform_indices = @transform_2, window_bounds = array<i64: 1, 32>}, {pipeline_mode = #tpu.pipeline_mode<synchronous>, transform_indices = @transform_3, window_bounds = array<i64: 1, 32>}, {pipeline_mode = #tpu.pipeline_mode<synchronous>, transform_indices = @transform_4, window_bounds = array<i64: 1, 32>}, {transform_indices = @transform_5, window_bounds = array<i64: 16, 32>}]} {
    %c0_i32 = arith.constant 0 : i32
    %0 = arith.cmpi eq, %arg1, %c0_i32 : i32
    %1 = arith.extui %0 : i1 to i32
    %c0_i32_0 = arith.constant 0 : i32
    %2 = arith.cmpi ne, %1, %c0_i32_0 : i32
    scf.if %2 {
      %c0_16 = arith.constant 0 : index
      %c0_17 = arith.constant 0 : index
      %16 = vector.load %arg4[%c0_16, %c0_17] : memref<1x32xf32, #tpu.memory_space<vmem>>, vector<1x32xf32>
      %17 = vector.shape_cast %16 : vector<1x32xf32> to vector<1x32xf32>
      %18 = vector.broadcast %17 : vector<1x32xf32> to vector<16x32xf32>
      %c0_18 = arith.constant 0 : index
      %c0_19 = arith.constant 0 : index
      %19 = vector.load %arg8[%c0_18, %c0_19] : memref<16x32xf32, #tpu.memory_space<vmem>>, vector<16x32xf32>
      tpu.vector_store %arg8[%c0_18, %c0_19], %18 {strides = array<i32>} : memref<16x32xf32, #tpu.memory_space<vmem>>, vector<16x32xf32>,
    } else {
    }
    %c0 = arith.constant 0 : index
    %c0_1 = arith.constant 0 : index
    %3 = vector.load %arg8[%c0, %c0_1] : memref<16x32xf32, #tpu.memory_space<vmem>>, vector<16x32xf32>
    %c0_2 = arith.constant 0 : index
    %c0_3 = arith.constant 0 : index
    %4 = vector.load %arg2[%c0_2, %c0_3] : memref<16x32xf32, #tpu.memory_space<vmem>>, vector<16x32xf32>
    %c0_4 = arith.constant 0 : index
    %c0_5 = arith.constant 0 : index
    %5 = vector.load %arg3[%c0_4, %c0_5] : memref<32x32xf32, #tpu.memory_space<vmem>>, vector<32x32xf32>
    %cst = arith.constant dense<0.000000e+00> : vector<16x32xf32>
    %6 = tpu.matmul %4, %5, %cst {dimension_numbers = #tpu.dot_dimension_numbers<[1], [0], [0], [1], [0, 0, 1, 1], [], []>} : vector<16x32xf32>, vector<32x32xf32>, vector<16x32xf32> -> vector<16x32xf32>
    %7 = arith.addf %3, %6 : vector<16x32xf32>
    %c0_6 = arith.constant 0 : index
    %c0_7 = arith.constant 0 : index
    %8 = vector.load %arg8[%c0_6, %c0_7] : memref<16x32xf32, #tpu.memory_space<vmem>>, vector<16x32xf32>
    tpu.vector_store %arg8[%c0_6, %c0_7], %7 {strides = array<i32>} : memref<16x32xf32, #tpu.memory_space<vmem>>, vector<16x32xf32>,
    %c0_8 = arith.constant 0 : index
    %c0_9 = arith.constant 0 : index
    %9 = vector.load %arg8[%c0_8, %c0_9] : memref<16x32xf32, #tpu.memory_space<vmem>>, vector<16x32xf32>
    %c0_10 = arith.constant 0 : index
    %c0_11 = arith.constant 0 : index
    %10 = vector.load %arg2[%c0_10, %c0_11] : memref<16x32xf32, #tpu.memory_space<vmem>>, vector<16x32xf32>
    %11 = arith.addf %9, %10 : vector<16x32xf32>
    %c0_12 = arith.constant 0 : index
    %c0_13 = arith.constant 0 : index
    %12 = vector.load %arg8[%c0_12, %c0_13] : memref<16x32xf32, #tpu.memory_space<vmem>>, vector<16x32xf32>
    tpu.vector_store %arg8[%c0_12, %c0_13], %11 {strides = array<i32>} : memref<16x32xf32, #tpu.memory_space<vmem>>, vector<16x32xf32>,
    %c0_i32_14 = arith.constant 0 : i32
    %13 = arith.cmpi eq, %arg1, %c0_i32_14 : i32
    %14 = arith.extui %13 : i1 to i32
    %c0_i32_15 = arith.constant 0 : i32
    %15 = arith.cmpi ne, %14, %c0_i32_15 : i32
    scf.if %15 {
      %c0_16 = arith.constant 0 : index
      %c0_17 = arith.constant 0 : index
      %16 = vector.load %arg8[%c0_16, %c0_17] : memref<16x32xf32, #tpu.memory_space<vmem>>, vector<16x32xf32>
      %cst_18 = arith.constant dense<0.000000e+00> : vector<16xf32>
      %17 = vector.multi_reduction <add>, %16, %cst_18 [1] : vector<16x32xf32> to vector<16xf32>
      %18 = vector.shape_cast %17 : vector<16xf32> to vector<16x1xf32>
      %cst_19 = arith.constant 3.200000e+01 : f32
      %19 = vector.broadcast %cst_19 : f32 to vector<16x1xf32>
      %20 = arith.divf %18, %19 : vector<16x1xf32>
      %21 = vector.broadcast %20 : vector<16x1xf32> to vector<16x32xf32>
      %22 = arith.subf %16, %21 : vector<16x32xf32>
      %23 = arith.mulf %22, %22 : vector<16x32xf32>
      %cst_20 = arith.constant dense<0.000000e+00> : vector<16xf32>
      %24 = vector.multi_reduction <add>, %23, %cst_20 [1] : vector<16x32xf32> to vector<16xf32>
      %25 = vector.shape_cast %24 : vector<16xf32> to vector<16x1xf32>
      %cst_21 = arith.constant 0.0322580636 : f32
      %26 = vector.broadcast %cst_21 : f32 to vector<16x1xf32>
      %27 = arith.mulf %25, %26 : vector<16x1xf32>
      %28 = math.sqrt %27 : vector<16x1xf32>
      %cst_22 = arith.constant 9.99999997E-7 : f32
      %29 = vector.broadcast %cst_22 : f32 to vector<16x1xf32>
      %30 = arith.addf %28, %29 : vector<16x1xf32>
      %31 = tpu.reciprocal %30 {approx = true} : vector<16x1xf32> -> vector<16x1xf32>
      %32 = arith.mulf %30, %31 : vector<16x1xf32>
      %cst_23 = arith.constant 2.000000e+00 : f32
      %33 = vector.broadcast %cst_23 : f32 to vector<16x1xf32>
      %34 = arith.subf %33, %32 : vector<16x1xf32>
      %35 = arith.mulf %31, %34 : vector<16x1xf32>
      %c0_24 = arith.constant 0 : index
      %c0_25 = arith.constant 0 : index
      %36 = vector.load %arg5[%c0_24, %c0_25] : memref<1x32xf32, #tpu.memory_space<vmem>>, vector<1x32xf32>
      %37 = vector.broadcast %35 : vector<16x1xf32> to vector<16x32xf32>
      %38 = arith.mulf %22, %37 : vector<16x32xf32>
      %39 = vector.broadcast %36 : vector<1x32xf32> to vector<16x32xf32>
      %40 = arith.mulf %39, %38 : vector<16x32xf32>
      %c0_26 = arith.constant 0 : index
      %c0_27 = arith.constant 0 : index
      %41 = vector.load %arg6[%c0_26, %c0_27] : memref<1x32xf32, #tpu.memory_space<vmem>>, vector<1x32xf32>
      %42 = vector.broadcast %41 : vector<1x32xf32> to vector<16x32xf32>
      %43 = arith.addf %40, %42 : vector<16x32xf32>
      %c0_28 = arith.constant 0 : index
      %c0_29 = arith.constant 0 : index
      %44 = vector.load %arg7[%c0_28, %c0_29] : memref<16x32xf32, #tpu.memory_space<vmem>>, vector<16x32xf32>
      tpu.vector_store %arg7[%c0_28, %c0_29], %43 {strides = array<i32>} : memref<16x32xf32, #tpu.memory_space<vmem>>, vector<16x32xf32>,
    } else {
    }
    return
  }
  func.func @transform_0(%arg0: i32, %arg1: i32) -> (i32, i32) {
    %c0_i32 = arith.constant 0 : i32
    return %arg0, %arg1 : i32, i32
  }
  func.func @transform_1(%arg0: i32, %arg1: i32) -> (i32, i32) {
    %c0_i32 = arith.constant 0 : i32
    %c0_i32_0 = arith.constant 0 : i32
    %c0_i32_1 = arith.constant 0 : i32
    return %c0_i32, %c0_i32_0 : i32, i32
  }
  func.func @transform_2(%arg0: i32, %arg1: i32) -> (i32, i32) {
    %c0_i32 = arith.constant 0 : i32
    %c0_i32_0 = arith.constant 0 : i32
    %c0_i32_1 = arith.constant 0 : i32
    return %c0_i32, %c0_i32_0 : i32, i32
  }
  func.func @transform_3(%arg0: i32, %arg1: i32) -> (i32, i32) {
    %c0_i32 = arith.constant 0 : i32
    %c0_i32_0 = arith.constant 0 : i32
    %c0_i32_1 = arith.constant 0 : i32
    return %c0_i32, %c0_i32_0 : i32, i32
  }
  func.func @transform_4(%arg0: i32, %arg1: i32) -> (i32, i32) {
    %c0_i32 = arith.constant 0 : i32
    %c0_i32_0 = arith.constant 0 : i32
    %c0_i32_1 = arith.constant 0 : i32
    return %c0_i32, %c0_i32_0 : i32, i32
  }
  func.func @transform_5(%arg0: i32, %arg1: i32) -> (i32, i32) {
    %c0_i32 = arith.constant 0 : i32
    %c0_i32_0 = arith.constant 0 : i32
    return %arg0, %c0_i32 : i32, i32
  }
}

</mosaic_0001>

<llo_original>
// kernel: tpu_custom_call.1
$region0: #{tpu_custom_call.1}
  #allocation0 [shape = 'u32[]', space=smem, size = 0x4, offset = 0x4, fixed_abs, tag = 'smem constant byte address 0x4 - core index']
  #allocation1 [shape = 'u32[144,128]{1,0:T(1,128)}', space=vmem, size = 0x12000, scoped, tag = 'internal scratch']
  #allocation2 [shape = 'f32[16,32]{1,0:T(8,128)}', space=vmem, size = 0x2000, scoped, tag = 'scratch operand']
  %s0 = inlined_call_operand.hbm [shape: f32[16,32], index: 0, kind: input, shape index: {}]
  %s1 = inlined_call_operand.hbm [shape: f32[32,32], index: 1, kind: input, shape index: {}]
  %s2 = inlined_call_operand.vmem [shape: f32[1,32], index: 2, kind: input, shape index: {}]
  %s3 = inlined_call_operand.vmem [shape: f32[1,32], index: 3, kind: input, shape index: {}]
  %s4 = inlined_call_operand.vmem [shape: f32[1,32], index: 4, kind: input, shape index: {}]
  %s5 = inlined_call_operand.hbm [shape: f32[16,32], index: 5, kind: output, shape index: {}]
  %s6 = sld [smem:[#allocation0]]
  $region46: #{tpu_custom_call.1} parent=0
    _
  %s8 = ssub.s32 1, %s6
  %s9 = scalar_select 0, %s8, %s6
  $region1: #{tpu_custom_call.1} parent=0
    #allocation3 [shape = 'u8[8192]{0}', space=vmem, size = 0x2000, scoped, tag = 'input window, operand 0, single buffered']
    #allocation4 [shape = 's32[1]{0}', space=sflag, size = 0x4, scoped, tag = 'scoped memory for tpu_custom_call.1']
    #allocation5 [shape = 's32[1]{0}', space=sflag, size = 0x4, scoped, tag = 'scoped memory for tpu_custom_call.1']
    #allocation6 [shape = 'u8[16384]{0}', space=vmem, size = 0x4000, scoped, tag = 'input window, operand 1, single buffered']
    #allocation7 [shape = 's32[1]{0}', space=sflag, size = 0x4, scoped, tag = 'scoped memory for tpu_custom_call.1']
    #allocation8 [shape = 'u8[8192]{0}', space=vmem, size = 0x2000, scoped, tag = 'output window, operand 0, single buffered']
    %10 = vsyncpa [#allocation4], 0
    %11 = vsyncpa [#allocation7], 0
    %12 = vsyncpa [#allocation5], 0
    // Predicated region
    $region2: #{tpu_custom_call.1} parent=1 // pred_check
      _
    $region3: #{tpu_custom_call.1} parent=1 // pred_check_branch
      %14 = sbr.rel (0) target = $region5
    $region4: #{tpu_custom_call.1} parent=1 // pred_region
      %s16 = ssub.s32 256, 256
      %17 = vsyncadd [#allocation4], %s16
      %s18 = sshll.u32 [#allocation3], 4
      %s19 = int_to_ptr.vmem [resolvable:$true] %s18
      %24 = dma.hbm_to_vmem [thread:$0]  %s0, 256, %s19, [#allocation4], 128, 128, 8
    $region5: #{tpu_custom_call.1} parent=1 // pred_fallthru
      _
    // Predicated region
    $region6: #{tpu_custom_call.1} parent=1 // pred_check
      _
    $region7: #{tpu_custom_call.1} parent=1 // pred_check_branch
      %26 = sbr.rel (0) target = $region9
    $region8: #{tpu_custom_call.1} parent=1 // pred_region
      %s28 = ssub.s32 512, 512
      %29 = vsyncadd [#allocation7], %s28
      %s30 = sshll.u32 [#allocation6], 4
      %s31 = int_to_ptr.vmem [resolvable:$true] %s30
      %36 = dma.hbm_to_vmem [thread:$0]  %s1, 512, %s31, [#allocation7], 128, 128, 8
    $region9: #{tpu_custom_call.1} parent=1 // pred_fallthru
      _
    // Predicated region
    $region10: #{tpu_custom_call.1} parent=1 // pred_check
      _
    $region11: #{tpu_custom_call.1} parent=1 // pred_check_branch
      %38 = sbr.rel (0) target = $region13
    $region12: #{tpu_custom_call.1} parent=1 // pred_region
      _
    $region13: #{tpu_custom_call.1} parent=1 // pred_fallthru
      _
    // Predicated region
    $region14: #{tpu_custom_call.1} parent=1 // pred_check
      _
    $region15: #{tpu_custom_call.1} parent=1 // pred_check_branch
      %40 = sbr.rel (0) target = $region17
    $region16: #{tpu_custom_call.1} parent=1 // pred_region
      _
    $region17: #{tpu_custom_call.1} parent=1 // pred_fallthru
      _
    // Predicated region
    $region18: #{tpu_custom_call.1} parent=1 // pred_check
      _
    $region19: #{tpu_custom_call.1} parent=1 // pred_check_branch
      %42 = sbr.rel (0) target = $region21
    $region20: #{tpu_custom_call.1} parent=1 // pred_region
      _
    $region21: #{tpu_custom_call.1} parent=1 // pred_fallthru
      _
    // Predicated region
    $region22: #{tpu_custom_call.1} parent=1 // pred_check
      _
    $region23: #{tpu_custom_call.1} parent=1 // pred_check_branch
      %44 = sbr.rel (0) target = $region25
    $region24: #{tpu_custom_call.1} parent=1 // pred_region
      %45 = dma.done [#allocation4], 256
    $region25: #{tpu_custom_call.1} parent=1 // pred_fallthru
      _
    // Predicated region
    $region26: #{tpu_custom_call.1} parent=1 // pred_check
      _
    $region27: #{tpu_custom_call.1} parent=1 // pred_check_branch
      %47 = sbr.rel (0) target = $region29
    $region28: #{tpu_custom_call.1} parent=1 // pred_region
      %48 = dma.done [#allocation7], 512
    $region29: #{tpu_custom_call.1} parent=1 // pred_fallthru
      _
    %p49 = scmp.eq.s32.totalorder 0, 0
    // Predicated region
    $region30: #{tpu_custom_call.1} parent=1 // pred_check
      %p50 = pneg %p49
    $region31: #{tpu_custom_call.1} parent=1 // pred_check_branch
      %52 = sbr.rel (%p50) target = $region33
    $region32: #{tpu_custom_call.1} parent=1 // pred_region
      %v53 = vld [vmem:[%s2] sm:$0x1]
      %v55 = vlaneseq
      %v56 = vshrl.u32 %v55, 7
      %v57 = vsub.s32 0, %v56
      %v58 = vrot.slane %v53, %v57
      %vm60 = vcmask 261120
      %61 = vst.msk [vmem:[#allocation2] sm:$0xff] %vm60, %v58
      %62 = vst.msk [vmem:[#allocation2 + $0x8] sm:$0xff] %vm60, %v58
    $region33: #{tpu_custom_call.1} parent=1 // pred_fallthru
      _
    %v63 = vld [vmem:[#allocation2] sm:$0xff]
    %v64 = vld [vmem:[#allocation2 + $0x8] sm:$0xff]
    %v65 = vld [vmem:[#allocation3] sm:$0xff]
    %v66 = vld [vmem:[#allocation3 + $0x8] sm:$0xff]
    %v67 = vld [vmem:[#allocation6] sm:$0xff]
    %v68 = vld [vmem:[#allocation6 + $0x8] sm:$0xff]
    %v69 = vld [vmem:[#allocation6 + $0x10] sm:$0xff]
    %v70 = vld [vmem:[#allocation6 + $0x18] sm:$0xff]
    %vm71 = vcmask 261120
    %v73 = vsel %vm71, %v65, 0
    %v76 = vsel %vm71, %v66, 0
    %78 = vmatprep.subr.mxu0 0.0
    %79 = vmatpush1.msra.mxu0 0.0
    %80 = vmatprep.subr.mxu0 0.0
    %81 = vmatpush1.msra.mxu0 0.0
    %82 = vmatprep.subr.mxu0 0.0
    %83 = vmatpush1.msra.mxu0 0.0
    %84 = vmatprep.subr.mxu0 0.0
    %85 = vmatpush1.msra.mxu0 0.0
    %86 = vmatprep.subr.mxu0 0.0
    %87 = vmatpush1.msra.mxu0 0.0
    %88 = vmatprep.subr.mxu0 0.0
    %89 = vmatpush1.msra.mxu0 0.0
    %90 = vmatprep.subr.mxu0 0.0
    %91 = vmatpush1.msra.mxu0 0.0
    %92 = vmatprep.subr.mxu0 0.0
    %93 = vmatpush1.msra.mxu0 0.0
    %94 = vmatprep.subr.mxu0 0.0
    %95 = vmatpush1.msra.mxu0 0.0
    %96 = vmatprep.subr.mxu0 0.0
    %97 = vmatpush1.msra.mxu0 0.0
    %98 = vmatprep.subr.mxu0 0.0
    %99 = vmatpush1.msra.mxu0 0.0
    %100 = vmatprep.subr.mxu0 0.0
    %101 = vmatpush1.msra.mxu0 0.0
    %102 = vmatprep.subr.mxu0 0.0
    %103 = vmatpush1.msra.mxu0 %v70
    %104 = vmatprep.subr.mxu0 0.0
    %105 = vmatpush1.msra.mxu0 %v69
    %106 = vmatprep.subr.mxu0 0.0
    %107 = vmatpush1.msra.mxu0 %v68
    %108 = vmatprep.subr.mxu0 0.0
    %109 = vmatpush1.msra.mxu0 %v67
    %110 = vmatprep.subr.mxu0 0.0
    %111 = vmatpush2.msra.mxu0 0.0
    %112 = vmatprep.subr.mxu0 0.0
    %113 = vmatpush2.msra.mxu0 0.0
    %114 = vmatprep.subr.mxu0 0.0
    %115 = vmatpush2.msra.mxu0 0.0
    %116 = vmatprep.subr.mxu0 0.0
    %117 = vmatpush2.msra.mxu0 0.0
    %118 = vmatprep.subr.mxu0 0.0
    %119 = vmatpush2.msra.mxu0 0.0
    %120 = vmatprep.subr.mxu0 0.0
    %121 = vmatpush2.msra.mxu0 0.0
    %122 = vmatprep.subr.mxu0 0.0
    %123 = vmatpush2.msra.mxu0 0.0
    %124 = vmatprep.subr.mxu0 0.0
    %125 = vmatpush2.msra.mxu0 0.0
    %126 = vmatprep.subr.mxu0 0.0
    %127 = vmatpush2.msra.mxu0 0.0
    %128 = vmatprep.subr.mxu0 0.0
    %129 = vmatpush2.msra.mxu0 0.0
    %130 = vmatprep.subr.mxu0 0.0
    %131 = vmatpush2.msra.mxu0 0.0
    %132 = vmatprep.subr.mxu0 0.0
    %133 = vmatpush2.msra.mxu0 0.0
    %134 = vmatprep.subr.mxu0 0.0
    %135 = vmatpush2.msra.mxu0 0.0
    %136 = vmatprep.subr.mxu0 0.0
    %137 = vmatpush2.msra.mxu0 0.0
    %138 = vmatprep.subr.mxu0 0.0
    %139 = vmatpush2.msra.mxu0 0.0
    %140 = vmatprep.subr.mxu0 0.0
    %141 = vmatpush2.msra.mxu0 0.0
    %142 = vmatprep.mubr.f32.mxu0 0.0
    %143 = vmatmul.mubr.f32.gmra.mxu0 %v73
    %v144 = vpop.f32.mrf.mxu0
    %v145 = vadd.f32 0.0, %v144
    %v146 = vpop.f32.mrf.mxu0
    %147 = vmatprep.mubr.f32.mxu0 0.0
    %148 = vmatmul.mubr.f32.gmra.mxu0 %v76
    %v149 = vpop.f32.mrf.mxu0
    %v150 = vadd.f32 0.0, %v149
    %v151 = vpop.f32.mrf.mxu0
    %152 = vdwg.mxu0
    %v153 = vadd.f32 %v63, %v145
    %v154 = vadd.f32 %v64, %v150
    %155 = vst.msk [vmem:[#allocation2] sm:$0xff] %vm71, %v153
    %156 = vst.msk [vmem:[#allocation2 + $0x8] sm:$0xff] %vm71, %v154
    %v157 = vld [vmem:[#allocation2] sm:$0xff]
    %v158 = vld [vmem:[#allocation2 + $0x8] sm:$0xff]
    %v159 = vld [vmem:[#allocation3] sm:$0xff]
    %v160 = vld [vmem:[#allocation3 + $0x8] sm:$0xff]
    %v161 = vadd.f32 %v157, %v159
    %v162 = vadd.f32 %v158, %v160
    %163 = vst.msk [vmem:[#allocation2] sm:$0xff] %vm71, %v161
    %164 = vst.msk [vmem:[#allocation2 + $0x8] sm:$0xff] %vm71, %v162
    // Predicated region
    $region34: #{tpu_custom_call.1} parent=1 // pred_check
      %p165 = pneg %p49
    $region35: #{tpu_custom_call.1} parent=1 // pred_check_branch
      %167 = sbr.rel (%p165) target = $region37
    $region36: #{tpu_custom_call.1} parent=1 // pred_region
      %v168 = vld [vmem:[#allocation2] sm:$0xff]
      %v169 = vld [vmem:[#allocation2 + $0x8] sm:$0xff]
      %v170 = vsel %vm71, %v168, 0.0
      %171 = vadd.xlane.f32.xlu0 %v170
      %v172 = vpop.xlane.xlu0 %171
      %v173 = vsel %vm71, %v169, 0.0
      %174 = vadd.xlane.f32.xlu0 %v173
      %v175 = vpop.xlane.xlu0 %174
      %v176 = vrcp.pop 32.0
      %v177 = vmul.f32 %v172, %v176
      %v178 = vmul.f32 %v175, %v176
      %v179 = vsub.f32 %v168, %v177
      %v180 = vsub.f32 %v169, %v178
      %v181 = vmul.f32 %v179, %v179
      %v182 = vmul.f32 %v180, %v180
      %v183 = vsel %vm71, %v181, 0.0
      %184 = vadd.xlane.f32.xlu0 %v183
      %v185 = vpop.xlane.xlu0 %184
      %v186 = vsel %vm71, %v182, 0.0
      %187 = vadd.xlane.f32.xlu0 %v186
      %v188 = vpop.xlane.xlu0 %187
      %v189 = vmul.f32 %v185, 0.032258064
      %v190 = vmul.f32 %v188, 0.032258064
      %v191 = vrsqrt.pop %v189
      %v192 = vmul.f32 %v189, %v191
      %vm193 = vcmp.eq.f32.partialorder %v189, inf
      %v194 = vsel %vm193, %v189, %v192
      %vm195 = vcmp.eq.f32.partialorder %v189, 0.0
      %v196 = vand.u32 %v189, 2147483648
      %v197 = vsel %vm195, %v196, %v194
      %v198 = vrsqrt.pop %v190
      %v199 = vmul.f32 %v190, %v198
      %vm200 = vcmp.eq.f32.partialorder %v190, inf
      %v201 = vsel %vm200, %v190, %v199
      %vm202 = vcmp.eq.f32.partialorder %v190, 0.0
      %v203 = vand.u32 %v190, 2147483648
      %v204 = vsel %vm202, %v203, %v201
      %v205 = vadd.f32 %v197, 1e-06
      %v206 = vadd.f32 %v204, 1e-06
      %v207 = vrcp.pop %v205
      %v208 = vrcp.pop %v206
      %v209 = vmul.f32 %v205, %v207
      %v210 = vmul.f32 %v206, %v208
      %v211 = vsub.f32 2.0, %v209
      %v212 = vsub.f32 2.0, %v210
      %v213 = vmul.f32 %v207, %v211
      %v214 = vmul.f32 %v208, %v212
      %v215 = vld [vmem:[%s3] sm:$0x1]
      %v216 = vmul.f32 %v179, %v213
      %v217 = vmul.f32 %v180, %v214
      %v219 = vlaneseq
      %v220 = vshrl.u32 %v219, 7
      %v221 = vsub.s32 0, %v220
      %v222 = vrot.slane %v215, %v221
      %v224 = vmul.f32 %v222, %v216
      %v225 = vmul.f32 %v222, %v217
      %v226 = vld [vmem:[%s4] sm:$0x1]
      %v228 = vlaneseq
      %v229 = vshrl.u32 %v228, 7
      %v230 = vsub.s32 0, %v229
      %v231 = vrot.slane %v226, %v230
      %v233 = vadd.f32 %v224, %v231
      %v234 = vadd.f32 %v225, %v231
      %235 = vst.msk [vmem:[#allocation8] sm:$0xff] %vm71, %v233
      %236 = vst.msk [vmem:[#allocation8 + $0x8] sm:$0xff] %vm71, %v234
    $region37: #{tpu_custom_call.1} parent=1 // pred_fallthru
      _
    // Predicated region
    $region38: #{tpu_custom_call.1} parent=1 // pred_check
      _
    $region39: #{tpu_custom_call.1} parent=1 // pred_check_branch
      %238 = sbr.rel (0) target = $region41
    $region40: #{tpu_custom_call.1} parent=1 // pred_region
      %s240 = ssub.s32 256, 256
      %241 = vsyncadd [#allocation5], %s240
      %s242 = sshll.u32 [#allocation8], 4
      %s243 = int_to_ptr.vmem [resolvable:$true] %s242
      %248 = dma.vmem_to_hbm [thread:$0]  %s243, 256, %s5, [#allocation5], 128, 128, 8
    $region41: #{tpu_custom_call.1} parent=1 // pred_fallthru
      _
    // Predicated region
    $region42: #{tpu_custom_call.1} parent=1 // pred_check
      _
    $region43: #{tpu_custom_call.1} parent=1 // pred_check_branch
      %250 = sbr.rel (0) target = $region45
    $region44: #{tpu_custom_call.1} parent=1 // pred_region
      %251 = dma.done [#allocation5], 256
    $region45: #{tpu_custom_call.1} parent=1 // pred_fallthru
      _
    %252 = vsyncpa [#allocation4], 1
    %253 = vsyncpa [#allocation7], 1
    %254 = vsyncpa [#allocation5], 1

</llo_original>
